<compile_context>
chip_gen: v7x
topology: tpu7x:2x2x1
jax: 0.10.0
libtpu: 0.0.40
codegen_flags: <defaults>
</compile_context>

<pallas_src>
import functools

import jax
import jax.numpy as jnp
from jax import lax
from jax.experimental import pallas as pl
from jax.experimental.pallas import tpu as pltpu


def _round_up(x, m):
    return ((x + m - 1) // m) * m


def _round_down(x, m):
    return (x // m) * m


def _linear_softpool_kernel(td_ref, out_ref, num_ref, den_ref, *, t_total, t_block):
    k = pl.program_id(2)

    @pl.when(k == 0)
    def _init():
        num_ref[...] = jnp.zeros_like(num_ref)
        den_ref[...] = jnp.zeros_like(den_ref)

    td = td_ref[...].astype(jnp.float32)          # (bB, bT, bC)

    # Mask the T remainder of the last (partial) reduction block.  Static
    # Python `if`: the select is only traced when T does not divide evenly.
    if t_total % t_block != 0:
        t_idx = k * t_block + lax.broadcasted_iota(jnp.int32, td.shape, 1)
        td = jnp.where(t_idx < t_total, td, 0.0)

    num_ref[...] += jnp.sum(td * td, axis=1)      # (bB, bC)
    den_ref[...] += jnp.sum(td, axis=1)           # (bB, bC)

    @pl.when(k == pl.num_programs(2) - 1)
    def _finalize():
        den = den_ref[...]
        # Guard only garbage lanes of partial boundary blocks (real sigmoid
        # activations are strictly positive); those lanes are dropped on the
        # masked output store anyway.
        den = jnp.where(den == 0.0, 1.0, den)
        # Exact division: runs once per output tile -> effectively free.
        out_ref[...] = (num_ref[...] / den).astype(out_ref.dtype)


def linear_soft_pool(logits, time_decision, *, block_t=None, block_c=None,
                     block_bytes=16 * 1024 * 1024):
    """logits: (B, T, C) [unused], time_decision: (B, T, C) -> (B, C)."""
    del logits  # unused by the computation; not DMA'd.

    B, T, C = time_decision.shape
    dtype = time_decision.dtype
    itemsize = jnp.dtype(dtype).itemsize

    # ---- C (lane) tile: full-extent when small (legal: block dim == array
    # dim), otherwise a multiple of 128 chosen to give >= 2 tiles so the
    # "parallel" C axis is megacore-shardable on v7x.
    if block_c is not None:
        bC = C if block_c >= C else max(128, _round_down(block_c, 128))
    elif C < 256:
        bC = C
    else:
        bC = min(512, _round_down(C // 2, 128))

    # ---- B tile: the whole batch (no padded rows).  Only if even the minimal
    # T tile would exceed the per-block budget do we tile B, and then with a
    # multiple of 8 so the (bB, bC) output block stays layout-legal.
    max_b = max(1, block_bytes // (8 * bC * itemsize))
    bB = B if B <= max_b else max(8, _round_down(max_b, 8))

    # ---- T (reduction) tile: as large as the per-block budget allows, so the
    # ~0.35 us per-grid-step overhead amortizes; remainder masked in-kernel.
    if block_t is not None:
        bT = T if block_t >= T else max(8, _round_down(block_t, 8))
    else:
        cap = max(8, _round_down(block_bytes // (bB * bC * itemsize), 8))
        if T <= cap:
            bT = T                                   # single reduction step
        else:
            n_k = pl.cdiv(T, cap)
            bT = _round_up(pl.cdiv(T, n_k), 8)       # balanced steps

    grid = (pl.cdiv(B, bB), pl.cdiv(C, bC), pl.cdiv(T, bT))

    # VMEM footprint: double-buffered input + double-buffered output + scratch.
    vmem_bytes = (2 * bB * bT * bC * itemsize
                  + 2 * bB * bC * itemsize
                  + 2 * bB * bC * 4)
    vmem_limit = int(min(100 * 1024 * 1024, vmem_bytes + 8 * 1024 * 1024))

    kernel = functools.partial(_linear_softpool_kernel, t_total=T, t_block=bT)

    out = pl.pallas_call(
        kernel,
        out_shape=jax.ShapeDtypeStruct((B, C), dtype),
        grid_spec=pltpu.PrefetchScalarGridSpec(
            num_scalar_prefetch=0,
            grid=grid,
            in_specs=[
                pl.BlockSpec((bB, bT, bC), lambda b, c, k: (b, k, c)),
            ],
            out_specs=pl.BlockSpec((bB, bC), lambda b, c, k: (b, c)),
            scratch_shapes=[
                pltpu.VMEM((bB, bC), jnp.float32),   # num accumulator
                pltpu.VMEM((bB, bC), jnp.float32),   # den accumulator
            ],
        ),
        compiler_params=pltpu.CompilerParams(
            # B and C tiles are independent -> megacore-shardable on v7x;
            # T is the accumulated reduction axis (last, "arbitrary").
            dimension_semantics=("parallel", "parallel", "arbitrary"),
            vmem_limit_bytes=vmem_limit,
        ),
        cost_estimate=pl.CostEstimate(
            flops=3 * B * T * C,
            transcendentals=0,
            bytes_accessed=B * T * C * itemsize + B * C * itemsize,
        ),
    )(time_decision)

    return out


def linear_soft_pool_ref(logits, time_decision):
    del logits
    td = time_decision.astype(jnp.float32)
    return ((td ** 2).sum(axis=1) / td.sum(axis=1)).astype(time_decision.dtype)


if __name__ == "__main__":
    key = jax.random.PRNGKey(0)

    # 1) Small shape matching the module's forward (B, T, C).
    k1, k2 = jax.random.split(key)
    B, T, C = 2, 8, 32
    logits = jax.random.normal(k1, (B, T, C), dtype=jnp.float32)
    # time_decision is sigmoid output in the model -> strictly positive.
    time_decision = jax.nn.sigmoid(jax.random.normal(k2, (B, T, C), dtype=jnp.float32))
    out = jax.block_until_ready(linear_soft_pool(logits, time_decision))
    ref = linear_soft_pool_ref(logits, time_decision)
    assert out.shape == (B, C), out.shape
    assert jnp.allclose(out, ref, atol=1e-5, rtol=1e-5), "mismatch vs reference (small)"

    # 2) Larger, non-aligned shape: C tiled into multiple-of-128 lane blocks
    #    (>=2 parallel C tiles), single full-T reduction block, no host padding.
    k3, k4 = jax.random.split(k1)
    B2, T2, C2 = 4, 1000, 527
    logits2 = jax.random.normal(k3, (B2, T2, C2), dtype=jnp.float32)
    td2 = jax.nn.sigmoid(jax.random.normal(k4, (B2, T2, C2), dtype=jnp.float32))
    out2 = jax.block_until_ready(linear_soft_pool(logits2, td2))
    ref2 = linear_soft_pool_ref(logits2, td2)
    assert out2.shape == (B2, C2), out2.shape
    assert jnp.allclose(out2, ref2, atol=1e-5, rtol=1e-5), "mismatch vs reference (large)"

    # 3) Forced small tiles: exercises the multi-step reduction accumulator,
    #    the in-kernel T-remainder mask, and partial boundary C blocks.
    k5, k6 = jax.random.split(k3)
    B3, T3, C3 = 2, 13, 160
    logits3 = jax.random.normal(k5, (B3, T3, C3), dtype=jnp.float32)
    td3 = jax.nn.sigmoid(jax.random.normal(k6, (B3, T3, C3), dtype=jnp.float32))
    out3 = jax.block_until_ready(
        linear_soft_pool(logits3, td3, block_t=8, block_c=128))
    ref3 = linear_soft_pool_ref(logits3, td3)
    assert out3.shape == (B3, C3), out3.shape
    assert jnp.allclose(out3, ref3, atol=1e-5, rtol=1e-5), "mismatch vs reference (tiled)"

    print("KERNEL_OK")
</pallas_src>

<mosaic_0001>
module attributes {stable_mosaic.version = 11 : i64} {
  func.func @_linear_softpool_kernel(%arg0: i32, %arg1: i32, %arg2: i32, %arg3: memref<2x8x32xf32, #tpu.memory_space<vmem>>, %arg4: memref<2x32xf32, #tpu.memory_space<vmem>>, %arg5: memref<2x32xf32, #tpu.memory_space<vmem>>, %arg6: memref<2x32xf32, #tpu.memory_space<vmem>>) attributes {dimension_semantics = [#tpu.dimension_semantics<parallel>, #tpu.dimension_semantics<parallel>, #tpu.dimension_semantics<arbitrary>], iteration_bounds = array<i64: 1, 1, 1>, scalar_prefetch = 0 : i64, scratch_operands = 2 : i64, tpu.core_type = #tpu.core_type<tc>, window_params = [{transform_indices = @transform_0, window_bounds = array<i64: 2, 8, 32>}, {transform_indices = @transform_1, window_bounds = array<i64: 2, 32>}]} {
    %c0_i32 = arith.constant 0 : i32
    %0 = arith.cmpi eq, %arg2, %c0_i32 : i32
    %1 = arith.extui %0 : i1 to i32
    %c0_i32_0 = arith.constant 0 : i32
    %2 = arith.cmpi ne, %1, %c0_i32_0 : i32
    scf.if %2 {
      %cst_14 = arith.constant 0.000000e+00 : f32
      %16 = vector.broadcast %cst_14 : f32 to vector<2x32xf32>
      %c0_15 = arith.constant 0 : index
      %c0_16 = arith.constant 0 : index
      %17 = vector.load %arg5[%c0_15, %c0_16] : memref<2x32xf32, #tpu.memory_space<vmem>>, vector<2x32xf32>
      tpu.vector_store %arg5[%c0_15, %c0_16], %16 {strides = array<i32>} : memref<2x32xf32, #tpu.memory_space<vmem>>, vector<2x32xf32>,
      %cst_17 = arith.constant 0.000000e+00 : f32
      %18 = vector.broadcast %cst_17 : f32 to vector<2x32xf32>
      %c0_18 = arith.constant 0 : index
      %c0_19 = arith.constant 0 : index
      %19 = vector.load %arg6[%c0_18, %c0_19] : memref<2x32xf32, #tpu.memory_space<vmem>>, vector<2x32xf32>
      tpu.vector_store %arg6[%c0_18, %c0_19], %18 {strides = array<i32>} : memref<2x32xf32, #tpu.memory_space<vmem>>, vector<2x32xf32>,
    } else {
    }
    %c0 = arith.constant 0 : index
    %c0_1 = arith.constant 0 : index
    %c0_2 = arith.constant 0 : index
    %3 = vector.load %arg3[%c0, %c0_1, %c0_2] : memref<2x8x32xf32, #tpu.memory_space<vmem>>, vector<2x8x32xf32>
    %c0_3 = arith.constant 0 : index
    %c0_4 = arith.constant 0 : index
    %4 = vector.load %arg5[%c0_3, %c0_4] : memref<2x32xf32, #tpu.memory_space<vmem>>, vector<2x32xf32>
    %5 = arith.mulf %3, %3 : vector<2x8x32xf32>
    %cst = arith.constant dense<0.000000e+00> : vector<2x32xf32>
    %6 = vector.multi_reduction <add>, %5, %cst [1] : vector<2x8x32xf32> to vector<2x32xf32>
    %7 = arith.addf %4, %6 : vector<2x32xf32>
    %c0_5 = arith.constant 0 : index
    %c0_6 = arith.constant 0 : index
    %8 = vector.load %arg5[%c0_5, %c0_6] : memref<2x32xf32, #tpu.memory_space<vmem>>, vector<2x32xf32>
    tpu.vector_store %arg5[%c0_5, %c0_6], %7 {strides = array<i32>} : memref<2x32xf32, #tpu.memory_space<vmem>>, vector<2x32xf32>,
    %c0_7 = arith.constant 0 : index
    %c0_8 = arith.constant 0 : index
    %9 = vector.load %arg6[%c0_7, %c0_8] : memref<2x32xf32, #tpu.memory_space<vmem>>, vector<2x32xf32>
    %cst_9 = arith.constant dense<0.000000e+00> : vector<2x32xf32>
    %10 = vector.multi_reduction <add>, %3, %cst_9 [1] : vector<2x8x32xf32> to vector<2x32xf32>
    %11 = arith.addf %9, %10 : vector<2x32xf32>
    %c0_10 = arith.constant 0 : index
    %c0_11 = arith.constant 0 : index
    %12 = vector.load %arg6[%c0_10, %c0_11] : memref<2x32xf32, #tpu.memory_space<vmem>>, vector<2x32xf32>
    tpu.vector_store %arg6[%c0_10, %c0_11], %11 {strides = array<i32>} : memref<2x32xf32, #tpu.memory_space<vmem>>, vector<2x32xf32>,
    %c0_i32_12 = arith.constant 0 : i32
    %13 = arith.cmpi eq, %arg2, %c0_i32_12 : i32
    %14 = arith.extui %13 : i1 to i32
    %c0_i32_13 = arith.constant 0 : i32
    %15 = arith.cmpi ne, %14, %c0_i32_13 : i32
    scf.if %15 {
      %c0_14 = arith.constant 0 : index
      %c0_15 = arith.constant 0 : index
      %16 = vector.load %arg6[%c0_14, %c0_15] : memref<2x32xf32, #tpu.memory_space<vmem>>, vector<2x32xf32>
      %cst_16 = arith.constant 0.000000e+00 : f32
      %17 = vector.broadcast %cst_16 : f32 to vector<2x32xf32>
      %18 = arith.cmpf oeq, %16, %17 : vector<2x32xf32>
      %cst_17 = arith.constant 1.000000e+00 : f32
      %19 = vector.broadcast %cst_17 : f32 to vector<2x32xf32>
      %20 = arith.select %18, %19, %16 : vector<2x32xi1>, vector<2x32xf32>
      %c0_18 = arith.constant 0 : index
      %c0_19 = arith.constant 0 : index
      %21 = vector.load %arg5[%c0_18, %c0_19] : memref<2x32xf32, #tpu.memory_space<vmem>>, vector<2x32xf32>
      %22 = arith.divf %21, %20 : vector<2x32xf32>
      %c0_20 = arith.constant 0 : index
      %c0_21 = arith.constant 0 : index
      %23 = vector.load %arg4[%c0_20, %c0_21] : memref<2x32xf32, #tpu.memory_space<vmem>>, vector<2x32xf32>
      tpu.vector_store %arg4[%c0_20, %c0_21], %22 {strides = array<i32>} : memref<2x32xf32, #tpu.memory_space<vmem>>, vector<2x32xf32>,
    } else {
    }
    return
  }
  func.func @transform_0(%arg0: i32, %arg1: i32, %arg2: i32) -> (i32, i32, i32) {
    %c0_i32 = arith.constant 0 : i32
    return %arg0, %arg2, %arg1 : i32, i32, i32
  }
  func.func @transform_1(%arg0: i32, %arg1: i32, %arg2: i32) -> (i32, i32) {
    %c0_i32 = arith.constant 0 : i32
    return %arg0, %arg1 : i32, i32
  }
}

</mosaic_0001>

<llo_original>
// kernel: tpu_custom_call.1
$region0: #{tpu_custom_call.1}
  #allocation0 [shape = 'u32[]', space=smem, size = 0x4, offset = 0x4, fixed_abs, tag = 'smem constant byte address 0x4 - core index']
  #allocation1 [shape = 'u32[144,128]{1,0:T(1,128)}', space=vmem, size = 0x12000, scoped, tag = 'internal scratch']
  #allocation2 [shape = 'f32[2,32]{1,0:T(2,128)}', space=vmem, size = 0x400, scoped, tag = 'scratch operand']
  #allocation3 [shape = 'f32[2,32]{1,0:T(2,128)}', space=vmem, size = 0x400, scoped, tag = 'scratch operand']
  %s0 = inlined_call_operand.hbm [shape: f32[2,8,32], index: 0, kind: input, shape index: {}]
  %s1 = inlined_call_operand.hbm [shape: f32[2,32], index: 1, kind: output, shape index: {}]
  %s2 = sld [smem:[#allocation0]]
  $region26: #{tpu_custom_call.1} parent=0
    _
  %s4 = ssub.s32 1, %s2
  %s5 = scalar_select 0, %s4, %s2
  $region1: #{tpu_custom_call.1} parent=0
    #allocation4 [shape = 'u8[8192]{0}', space=vmem, size = 0x2000, scoped, tag = 'input window, operand 0, single buffered']
    #allocation5 [shape = 's32[1]{0}', space=sflag, size = 0x4, scoped, tag = 'scoped memory for tpu_custom_call.1']
    #allocation6 [shape = 's32[1]{0}', space=sflag, size = 0x4, scoped, tag = 'scoped memory for tpu_custom_call.1']
    #allocation7 [shape = 'u8[1024]{0}', space=vmem, size = 0x400, scoped, tag = 'output window, operand 0, single buffered']
    %6 = vsyncpa [#allocation5], 0
    %7 = vsyncpa [#allocation6], 0
    // Predicated region
    $region2: #{tpu_custom_call.1} parent=1 // pred_check
      _
    $region3: #{tpu_custom_call.1} parent=1 // pred_check_branch
      %9 = sbr.rel (0) target = $region5
    $region4: #{tpu_custom_call.1} parent=1 // pred_region
      %s11 = ssub.s32 256, 256
      %12 = vsyncadd [#allocation5], %s11
      %s13 = sshll.u32 [#allocation4], 4
      %s14 = int_to_ptr.vmem [resolvable:$true] %s13
      %19 = dma.hbm_to_vmem [thread:$0]  %s0, 256, %s14, [#allocation5], 128, 128, 8
    $region5: #{tpu_custom_call.1} parent=1 // pred_fallthru
      _
    // Predicated region
    $region6: #{tpu_custom_call.1} parent=1 // pred_check
      _
    $region7: #{tpu_custom_call.1} parent=1 // pred_check_branch
      %21 = sbr.rel (0) target = $region9
    $region8: #{tpu_custom_call.1} parent=1 // pred_region
      %22 = dma.done [#allocation5], 256
    $region9: #{tpu_custom_call.1} parent=1 // pred_fallthru
      _
    %p23 = scmp.eq.s32.totalorder 0, 0
    // Predicated region
    $region10: #{tpu_custom_call.1} parent=1 // pred_check
      %p24 = pneg %p23
    $region11: #{tpu_custom_call.1} parent=1 // pred_check_branch
      %26 = sbr.rel (%p24) target = $region13
    $region12: #{tpu_custom_call.1} parent=1 // pred_region
      %vm27 = vcmask 254976
      %28 = vst.msk [vmem:[#allocation2] sm:$0x3] %vm27, 0.0
      %29 = vst.msk [vmem:[#allocation3] sm:$0x3] %vm27, 0.0
    $region13: #{tpu_custom_call.1} parent=1 // pred_fallthru
      _
    %v30 = vld [vmem:[#allocation4] sm:$0xff]
    %v31 = vld [vmem:[#allocation4 + $0x8] sm:$0xff]
    %v32 = vld [vmem:[#allocation2] sm:$0x3]
    %v33 = vmul.f32 %v30, %v30
    %v34 = vmul.f32 %v31, %v31
    %vm35 = vcmask 261120
    %v36 = vsel %vm35, %v33, 0.0
    %v37 = vrot.slane %v36, 4
    %v38 = vadd.f32 %v36, %v37
    %v39 = vrot.slane %v38, 2
    %v40 = vadd.f32 %v38, %v39
    %v41 = vrot.slane %v40, 1
    %v42 = vadd.f32 %v40, %v41
    %v43 = vsel %vm35, %v34, 0.0
    %v44 = vrot.slane %v43, 4
    %v45 = vadd.f32 %v43, %v44
    %v46 = vrot.slane %v45, 2
    %v47 = vadd.f32 %v45, %v46
    %v48 = vrot.slane %v47, 1
    %v49 = vadd.f32 %v47, %v48
    %vm52 = vcmask 1041409
    %v53 = vsel %vm52, %v49, %v42
    %v55 = vadd.f32 %v32, %v53
    %vm56 = vcmask 254976
    %57 = vst.msk [vmem:[#allocation2] sm:$0x3] %vm56, %v55
    %v58 = vld [vmem:[#allocation3] sm:$0x3]
    %v59 = vsel %vm35, %v30, 0.0
    %v60 = vrot.slane %v59, 4
    %v61 = vadd.f32 %v59, %v60
    %v62 = vrot.slane %v61, 2
    %v63 = vadd.f32 %v61, %v62
    %v64 = vrot.slane %v63, 1
    %v65 = vadd.f32 %v63, %v64
    %v66 = vsel %vm35, %v31, 0.0
    %v67 = vrot.slane %v66, 4
    %v68 = vadd.f32 %v66, %v67
    %v69 = vrot.slane %v68, 2
    %v70 = vadd.f32 %v68, %v69
    %v71 = vrot.slane %v70, 1
    %v72 = vadd.f32 %v70, %v71
    %v75 = vsel %vm52, %v72, %v65
    %v77 = vadd.f32 %v58, %v75
    %78 = vst.msk [vmem:[#allocation3] sm:$0x3] %vm56, %v77
    // Predicated region
    $region14: #{tpu_custom_call.1} parent=1 // pred_check
      %p79 = pneg %p23
    $region15: #{tpu_custom_call.1} parent=1 // pred_check_branch
      %81 = sbr.rel (%p79) target = $region17
    $region16: #{tpu_custom_call.1} parent=1 // pred_region
      %v82 = vld [vmem:[#allocation3] sm:$0x3]
      %vm83 = vcmp.eq.f32.partialorder %v82, 0.0
      %v84 = vsel %vm83, 1.0, %v82
      %v85 = vld [vmem:[#allocation2] sm:$0x3]
      %v86 = vrcp.pop %v84
      %v87 = vmul.f32 %v85, %v86
      %88 = vst.msk [vmem:[#allocation7] sm:$0x3] %vm56, %v87
    $region17: #{tpu_custom_call.1} parent=1 // pred_fallthru
      _
    // Predicated region
    $region18: #{tpu_custom_call.1} parent=1 // pred_check
      _
    $region19: #{tpu_custom_call.1} parent=1 // pred_check_branch
      %90 = sbr.rel (0) target = $region21
    $region20: #{tpu_custom_call.1} parent=1 // pred_region
      %s92 = ssub.s32 32, 32
      %93 = vsyncadd [#allocation6], %s92
      %s95 = sshll.u32 [#allocation7], 4
      %s96 = int_to_ptr.vmem [resolvable:$true] %s95
      %98 = dma.vmem_to_hbm [thread:$0]  %s96, 32, %s1, [#allocation6]
    $region21: #{tpu_custom_call.1} parent=1 // pred_fallthru
      _
    // Predicated region
    $region22: #{tpu_custom_call.1} parent=1 // pred_check
      _
    $region23: #{tpu_custom_call.1} parent=1 // pred_check_branch
      %100 = sbr.rel (0) target = $region25
    $region24: #{tpu_custom_call.1} parent=1 // pred_region
      %101 = dma.done [#allocation6], 32
    $region25: #{tpu_custom_call.1} parent=1 // pred_fallthru
      _
    %102 = vsyncpa [#allocation5], 1
    %103 = vsyncpa [#allocation6], 1

</llo_original>
